<compile_context>
chip_gen: v5e
topology: v5e:2x2
jax: 0.10.0
libtpu: 0.0.40
codegen_flags: <defaults>
</compile_context>

<pallas_src>
import functools

import jax
import jax.numpy as jnp
from jax.experimental import pallas as pl
from jax.experimental.pallas import tpu as pltpu

LANES = 128
MAX_BLOCK_ROWS = 1024        # (1024, 128) f32 = 512 KiB / buffer; pass-2 peak ~3 MiB
_PAD_LOGIT = -1e9            # BCE(x=_PAD_LOGIT, t=0) == 0  -> padding is sum-neutral


def _round_up(n, m):
    return ((n + m - 1) // m) * m


# ----------------------------- kernel 1: BCE sum ------------------------------
def _bce_sum_kernel(x_ref, t_ref, sum_ref, acc_ref):
    @pl.when(pl.program_id(0) == 0)
    def _():
        acc_ref[...] = jnp.zeros_like(acc_ref)

    x = x_ref[...].astype(jnp.float32)
    t = t_ref[...].astype(jnp.float32)
    # numerically stable BCE-with-logits (same formula PyTorch uses):
    #   max(x, 0) - x*t + log(1 + exp(-|x|))
    bce = jnp.maximum(x, 0.0) - x * t + jnp.log1p(jnp.exp(-jnp.abs(x)))
    acc_ref[...] += bce                       # pure VPU, no cross-lane work per step

    @pl.when(pl.program_id(0) == pl.num_programs(0) - 1)
    def _():
        # single cross-lane/sublane reduce, once per kernel
        sum_ref[...] = jnp.zeros_like(sum_ref) + jnp.sum(acc_ref[...])


# ------------------------- kernel 2: focal elementwise -------------------------
def _focal_elementwise_kernel(sum_ref, x_ref, t_ref, o_ref, *, gamma, scale):
    # scalar BCE sum (SMEM); alpha and 1/N are folded into `scale` at compile time
    coef = sum_ref[0, 0] * scale
    x = x_ref[...].astype(jnp.float32)
    t = t_ref[...].astype(jnp.float32)
    d = jnp.abs(t - jax.nn.sigmoid(x))

    g = float(gamma)
    if g == 1.0:
        mod = d
    elif g == int(g) and g > 0:
        # integer gamma (incl. the default gamma=2): repeated VPU multiplies
        # instead of the EUP exp/log path of a float pow.
        mod = d
        for _ in range(int(g) - 1):
            mod = mod * d
    else:
        # TODO(synk): general float gamma uses exp(g*log(d)); gamma <= 0 at d == 0
        # is undefined (matches the PyTorch behavior of pow for gamma > 0 only).
        mod = d ** g

    o_ref[...] = (coef * mod).astype(o_ref.dtype)


# ----------------------------------- wrapper -----------------------------------
@functools.partial(jax.jit, static_argnames=("gamma", "alpha"))
def focal_loss(logits, targets, gamma=2.0, alpha=1.0):
    """Pallas TPU implementation of FocalLoss.forward (reduction='mean')."""
    assert logits.shape == targets.shape
    orig_shape = logits.shape
    dtype = logits.dtype
    total = logits.size

    rows = -(-total // LANES)
    block_rows = min(MAX_BLOCK_ROWS, _round_up(rows, 8))
    rows_padded = _round_up(rows, block_rows)
    padded_total = rows_padded * LANES
    n_tiles = rows_padded // block_rows
    pad = padded_total - total

    x_flat = logits.reshape(-1)
    t_flat = targets.astype(dtype).reshape(-1)
    if pad:
        x_flat = jnp.concatenate([x_flat, jnp.full((pad,), _PAD_LOGIT, dtype)])
        t_flat = jnp.concatenate([t_flat, jnp.zeros((pad,), dtype)])
    x2 = x_flat.reshape(rows_padded, LANES)
    t2 = t_flat.reshape(rows_padded, LANES)

    tile_spec = pl.BlockSpec((block_rows, LANES), lambda i: (i, 0))
    itemsize = int(jnp.dtype(dtype).itemsize)

    # --- pass 1: global sum of per-element BCE-with-logits ---
    bce_sum = pl.pallas_call(
        _bce_sum_kernel,
        out_shape=jax.ShapeDtypeStruct((1, 1), jnp.float32),
        grid_spec=pltpu.PrefetchScalarGridSpec(
            num_scalar_prefetch=0,
            grid=(n_tiles,),
            in_specs=[tile_spec, tile_spec],
            out_specs=pl.BlockSpec((1, 1), lambda i: (0, 0)),
            scratch_shapes=[pltpu.VMEM((block_rows, LANES), jnp.float32)],
        ),
        compiler_params=pltpu.CompilerParams(
            dimension_semantics=("arbitrary",)),
        cost_estimate=pl.CostEstimate(
            flops=6 * padded_total,
            transcendentals=2 * padded_total,
            bytes_accessed=2 * padded_total * itemsize + 4),
    )(x2, t2)

    # mean + alpha folded into a single compile-time scalar (no intervening HLO op)
    scale = float(alpha) / float(total)

    # Alias the output onto x2 only when x2 is a fresh intermediate (padded path);
    # when pad == 0, x2 may be a bitcast of the (non-donated) caller buffer and
    # aliasing would force XLA to insert a defensive copy.
    aliases = {1: 0} if pad else {}

    # --- pass 2: elementwise focal modulation of the scalar mean loss ---
    out2 = pl.pallas_call(
        functools.partial(_focal_elementwise_kernel, gamma=gamma, scale=scale),
        out_shape=jax.ShapeDtypeStruct((rows_padded, LANES), dtype),
        grid_spec=pltpu.PrefetchScalarGridSpec(
            num_scalar_prefetch=0,
            grid=(n_tiles,),
            in_specs=[
                pl.BlockSpec((1, 1), lambda i: (0, 0),
                             memory_space=pltpu.SMEM),
                tile_spec,
                tile_spec,
            ],
            out_specs=tile_spec,
        ),
        compiler_params=pltpu.CompilerParams(
            dimension_semantics=("parallel",)),
        cost_estimate=pl.CostEstimate(
            flops=6 * padded_total,
            transcendentals=2 * padded_total,
            bytes_accessed=3 * padded_total * itemsize + 4),
        input_output_aliases=aliases,
    )(bce_sum, x2, t2)

    return out2.reshape(-1)[:total].reshape(orig_shape)


# ----------------------------------- reference ----------------------------------
def focal_loss_ref(logits, targets, gamma=2.0, alpha=1.0):
    x = logits.astype(jnp.float32)
    t = targets.astype(jnp.float32)
    bce = jnp.maximum(x, 0.0) - x * t + jnp.log1p(jnp.exp(-jnp.abs(x)))
    mean_bce = jnp.mean(bce)
    return (mean_bce * alpha * jnp.abs(t - jax.nn.sigmoid(x)) ** gamma).astype(
        logits.dtype)


if __name__ == "__main__":
    key = jax.random.PRNGKey(0)
    k1, k2, k3, k4 = jax.random.split(key, 4)

    # NCHW inputs, consistent with the PyTorch module's typical use.
    x = jax.random.normal(k1, (2, 4, 16, 16), dtype=jnp.float32)
    t = (jax.random.uniform(k2, (2, 4, 16, 16)) > 0.5).astype(jnp.float32)

    out = focal_loss(x, t, gamma=2.0, alpha=1.0)
    out = jax.block_until_ready(out)
    ref = focal_loss_ref(x, t, gamma=2.0, alpha=1.0)
    assert out.shape == x.shape
    assert jnp.allclose(out, ref, atol=1e-5, rtol=1e-5), (
        float(jnp.max(jnp.abs(out - ref))))

    # Non-(8*128)-aligned shape exercises the padded / masked-tail path.
    x2 = jax.random.normal(k3, (2, 3, 7, 5), dtype=jnp.float32)
    t2 = (jax.random.uniform(k4, (2, 3, 7, 5)) > 0.5).astype(jnp.float32)
    out2 = jax.block_until_ready(focal_loss(x2, t2, gamma=2.0, alpha=1.0))
    ref2 = focal_loss_ref(x2, t2, gamma=2.0, alpha=1.0)
    assert out2.shape == x2.shape
    assert jnp.allclose(out2, ref2, atol=1e-5, rtol=1e-5), (
        float(jnp.max(jnp.abs(out2 - ref2))))

    print("KERNEL_OK")
</pallas_src>

<mosaic_0001>
module attributes {stable_mosaic.version = 11 : i64} {
  func.func @_focal_elementwise_kernel(%arg0: i32, %arg1: memref<1x1xf32, #tpu.memory_space<smem>>, %arg2: memref<16x128xf32, #tpu.memory_space<vmem>>, %arg3: memref<16x128xf32, #tpu.memory_space<vmem>>, %arg4: memref<16x128xf32, #tpu.memory_space<vmem>>) attributes {dimension_semantics = [#tpu.dimension_semantics<parallel>], iteration_bounds = array<i64: 1>, scalar_prefetch = 0 : i64, scratch_operands = 0 : i64, tpu.core_type = #tpu.core_type<tc>, window_params = [{transform_indices = @transform_0, window_bounds = array<i64: 1, 1>}, {transform_indices = @transform_1, window_bounds = array<i64: 16, 128>}, {transform_indices = @transform_2, window_bounds = array<i64: 16, 128>}, {transform_indices = @transform_3, window_bounds = array<i64: 16, 128>}]} {
    %c0 = arith.constant 0 : index
    %c0_0 = arith.constant 0 : index
    %0 = memref.load %arg1[%c0, %c0_0] : memref<1x1xf32, #tpu.memory_space<smem>>
    %cst = arith.constant 4.8828125E-4 : f32
    %1 = arith.mulf %0, %cst : f32
    %c0_1 = arith.constant 0 : index
    %c0_2 = arith.constant 0 : index
    %2 = vector.load %arg2[%c0_1, %c0_2] : memref<16x128xf32, #tpu.memory_space<vmem>>, vector<16x128xf32>
    %c0_3 = arith.constant 0 : index
    %c0_4 = arith.constant 0 : index
    %3 = vector.load %arg3[%c0_3, %c0_4] : memref<16x128xf32, #tpu.memory_space<vmem>>, vector<16x128xf32>
    %4 = arith.negf %2 : vector<16x128xf32>
    %5 = math.exp %4 : vector<16x128xf32>
    %cst_5 = arith.constant 1.000000e+00 : f32
    %6 = vector.broadcast %cst_5 : f32 to vector<16x128xf32>
    %7 = arith.addf %6, %5 : vector<16x128xf32>
    %8 = arith.divf %6, %7 : vector<16x128xf32>
    %9 = arith.subf %3, %8 : vector<16x128xf32>
    %10 = math.absf %9 : vector<16x128xf32>
    %11 = arith.mulf %10, %10 : vector<16x128xf32>
    %12 = vector.broadcast %1 : f32 to vector<16x128xf32>
    %13 = arith.mulf %12, %11 : vector<16x128xf32>
    %c0_6 = arith.constant 0 : index
    %c0_7 = arith.constant 0 : index
    %14 = vector.load %arg4[%c0_6, %c0_7] : memref<16x128xf32, #tpu.memory_space<vmem>>, vector<16x128xf32>
    tpu.vector_store %arg4[%c0_6, %c0_7], %13 {strides = array<i32>} : memref<16x128xf32, #tpu.memory_space<vmem>>, vector<16x128xf32>,
    return
  }
  func.func @transform_0(%arg0: i32) -> (i32, i32) {
    %c0_i32 = arith.constant 0 : i32
    %c0_i32_0 = arith.constant 0 : i32
    %c0_i32_1 = arith.constant 0 : i32
    return %c0_i32, %c0_i32_0 : i32, i32
  }
  func.func @transform_1(%arg0: i32) -> (i32, i32) {
    %c0_i32 = arith.constant 0 : i32
    %c0_i32_0 = arith.constant 0 : i32
    return %arg0, %c0_i32 : i32, i32
  }
  func.func @transform_2(%arg0: i32) -> (i32, i32) {
    %c0_i32 = arith.constant 0 : i32
    %c0_i32_0 = arith.constant 0 : i32
    return %arg0, %c0_i32 : i32, i32
  }
  func.func @transform_3(%arg0: i32) -> (i32, i32) {
    %c0_i32 = arith.constant 0 : i32
    %c0_i32_0 = arith.constant 0 : i32
    return %arg0, %c0_i32 : i32, i32
  }
}

module attributes {stable_mosaic.version = 11 : i64} {
  func.func @_bce_sum_kernel(%arg0: i32, %arg1: memref<16x128xf32, #tpu.memory_space<vmem>>, %arg2: memref<16x128xf32, #tpu.memory_space<vmem>>, %arg3: memref<1x1xf32, #tpu.memory_space<vmem>>, %arg4: memref<16x128xf32, #tpu.memory_space<vmem>>) attributes {dimension_semantics = [#tpu.dimension_semantics<arbitrary>], iteration_bounds = array<i64: 1>, scalar_prefetch = 0 : i64, scratch_operands = 1 : i64, tpu.core_type = #tpu.core_type<tc>, window_params = [{transform_indices = @transform_0, window_bounds = array<i64: 16, 128>}, {transform_indices = @transform_1, window_bounds = array<i64: 16, 128>}, {pipeline_mode = #tpu.pipeline_mode<synchronous>, transform_indices = @transform_2, window_bounds = array<i64: 1, 1>}]} {
    %c0_i32 = arith.constant 0 : i32
    %0 = arith.cmpi eq, %arg0, %c0_i32 : i32
    %1 = arith.extui %0 : i1 to i32
    %c0_i32_0 = arith.constant 0 : i32
    %2 = arith.cmpi ne, %1, %c0_i32_0 : i32
    scf.if %2 {
      %cst_11 = arith.constant 0.000000e+00 : f32
      %21 = vector.broadcast %cst_11 : f32 to vector<16x128xf32>
      %c0_12 = arith.constant 0 : index
      %c0_13 = arith.constant 0 : index
      %22 = vector.load %arg4[%c0_12, %c0_13] : memref<16x128xf32, #tpu.memory_space<vmem>>, vector<16x128xf32>
      tpu.vector_store %arg4[%c0_12, %c0_13], %21 {strides = array<i32>} : memref<16x128xf32, #tpu.memory_space<vmem>>, vector<16x128xf32>,
    } else {
    }
    %c0 = arith.constant 0 : index
    %c0_1 = arith.constant 0 : index
    %3 = vector.load %arg1[%c0, %c0_1] : memref<16x128xf32, #tpu.memory_space<vmem>>, vector<16x128xf32>
    %c0_2 = arith.constant 0 : index
    %c0_3 = arith.constant 0 : index
    %4 = vector.load %arg2[%c0_2, %c0_3] : memref<16x128xf32, #tpu.memory_space<vmem>>, vector<16x128xf32>
    %cst = arith.constant 0.000000e+00 : f32
    %5 = vector.broadcast %cst : f32 to vector<16x128xf32>
    %6 = arith.maximumf %3, %5 : vector<16x128xf32>
    %7 = arith.mulf %3, %4 : vector<16x128xf32>
    %8 = arith.subf %6, %7 : vector<16x128xf32>
    %9 = math.absf %3 : vector<16x128xf32>
    %cst_4 = arith.constant 0.000000e+00 : f32
    %10 = vector.broadcast %cst_4 : f32 to vector<16x128xf32>
    %11 = arith.subf %10, %9 : vector<16x128xf32>
    %12 = math.exp %11 : vector<16x128xf32>
    %13 = math.log1p %12 : vector<16x128xf32>
    %14 = arith.addf %8, %13 : vector<16x128xf32>
    %c0_5 = arith.constant 0 : index
    %c0_6 = arith.constant 0 : index
    %15 = vector.load %arg4[%c0_5, %c0_6] : memref<16x128xf32, #tpu.memory_space<vmem>>, vector<16x128xf32>
    %16 = arith.addf %15, %14 : vector<16x128xf32>
    %c0_7 = arith.constant 0 : index
    %c0_8 = arith.constant 0 : index
    %17 = vector.load %arg4[%c0_7, %c0_8] : memref<16x128xf32, #tpu.memory_space<vmem>>, vector<16x128xf32>
    tpu.vector_store %arg4[%c0_7, %c0_8], %16 {strides = array<i32>} : memref<16x128xf32, #tpu.memory_space<vmem>>, vector<16x128xf32>,
    %c0_i32_9 = arith.constant 0 : i32
    %18 = arith.cmpi eq, %arg0, %c0_i32_9 : i32
    %19 = arith.extui %18 : i1 to i32
    %c0_i32_10 = arith.constant 0 : i32
    %20 = arith.cmpi ne, %19, %c0_i32_10 : i32
    scf.if %20 {
      %cst_11 = arith.constant 0.000000e+00 : f32
      %21 = vector.broadcast %cst_11 : f32 to vector<1x1xf32>
      %c0_12 = arith.constant 0 : index
      %c0_13 = arith.constant 0 : index
      %22 = vector.load %arg4[%c0_12, %c0_13] : memref<16x128xf32, #tpu.memory_space<vmem>>, vector<16x128xf32>
      %23 = vector.shape_cast %22 : vector<16x128xf32> to vector<1x16x128xf32>
      %cst_14 = arith.constant dense<0.000000e+00> : vector<1xf32>
      %24 = vector.multi_reduction <add>, %23, %cst_14 [1, 2] : vector<1x16x128xf32> to vector<1xf32>
      %25 = vector.shape_cast %24 : vector<1xf32> to vector<1x1x1xf32>
      %26 = vector.extract %25[0, 0, 0] : f32 from vector<1x1x1xf32>
      %27 = vector.broadcast %26 : f32 to vector<1x1xf32>
      %28 = arith.addf %21, %27 : vector<1x1xf32>
      %c0_15 = arith.constant 0 : index
      %c0_16 = arith.constant 0 : index
      %29 = vector.load %arg3[%c0_15, %c0_16] : memref<1x1xf32, #tpu.memory_space<vmem>>, vector<1x1xf32>
      tpu.vector_store %arg3[%c0_15, %c0_16], %28 {strides = array<i32>} : memref<1x1xf32, #tpu.memory_space<vmem>>, vector<1x1xf32>,
    } else {
    }
    return
  }
  func.func @transform_0(%arg0: i32) -> (i32, i32) {
    %c0_i32 = arith.constant 0 : i32
    %c0_i32_0 = arith.constant 0 : i32
    return %arg0, %c0_i32 : i32, i32
  }
  func.func @transform_1(%arg0: i32) -> (i32, i32) {
    %c0_i32 = arith.constant 0 : i32
    %c0_i32_0 = arith.constant 0 : i32
    return %arg0, %c0_i32 : i32, i32
  }
  func.func @transform_2(%arg0: i32) -> (i32, i32) {
    %c0_i32 = arith.constant 0 : i32
    %c0_i32_0 = arith.constant 0 : i32
    %c0_i32_1 = arith.constant 0 : i32
    return %c0_i32, %c0_i32_0 : i32, i32
  }
}

</mosaic_0001>

<llo_original>
// kernel: focal_loss.3
$region0: #{focal_loss.3}
  #allocation0 [shape = 'u32[]', space=smem, size = 0x4, offset = 0x4, fixed_abs, tag = 'smem constant byte address 0x4 - core index']
  #allocation1 [shape = 'u32[72,128]{1,0:T(1,128)}', space=vmem, size = 0x9000, scoped, tag = 'internal scratch']
  #allocation2 [shape = 'f32[1,1]{1,0:T(1,128)S(6)}', space=smem, size = 0x200, scoped, tag = 'scoped memory for focal_loss.3']
  %s0 = inlined_call_operand.<no memory space> [shape: f32[1,1], index: 0, kind: input, shape index: {}]
  %s1 = inlined_call_operand.vmem [shape: f32[16,128], index: 1, kind: input, shape index: {}]
  %s2 = inlined_call_operand.vmem [shape: f32[16,128], index: 2, kind: input, shape index: {}]
  %s3 = inlined_call_operand.vmem [shape: f32[16,128], index: 3, kind: output, shape index: {}]
  %s4 = sld [smem:[#allocation0]]
  $region22: #{focal_loss.3} parent=0
    _
  %s6 = ssub.s32 1, %s4
  %s7 = scalar_select 0, %s6, %s4
  %8 = sst [smem:[#allocation2]] %s0
  // Predicated region
  $region2: #{focal_loss.3} parent=0 // pred_check
    _
  $region3: #{focal_loss.3} parent=0 // pred_check_branch
    %10 = sbr.rel (0) target = $region5
  $region4: #{focal_loss.3} parent=0 // pred_region
    _
  $region5: #{focal_loss.3} parent=0 // pred_fallthru
    _
  // Predicated region
  $region6: #{focal_loss.3} parent=0 // pred_check
    _
  $region7: #{focal_loss.3} parent=0 // pred_check_branch
    %12 = sbr.rel (0) target = $region9
  $region8: #{focal_loss.3} parent=0 // pred_region
    _
  $region9: #{focal_loss.3} parent=0 // pred_fallthru
    _
  // Predicated region
  $region10: #{focal_loss.3} parent=0 // pred_check
    _
  $region11: #{focal_loss.3} parent=0 // pred_check_branch
    %14 = sbr.rel (0) target = $region13
  $region12: #{focal_loss.3} parent=0 // pred_region
    _
  $region13: #{focal_loss.3} parent=0 // pred_fallthru
    _
  %s15 = sld [smem:[#allocation2]]
  %s16 = smul.f32 %s15, 0.00048828125
  %v17 = vld [vmem:[%s1] sm:$0xff]
  %v18 = vld [vmem:[%s1 + $0x8] sm:$0xff]
  %v19 = vld [vmem:[%s2] sm:$0xff]
  %v20 = vld [vmem:[%s2 + $0x8] sm:$0xff]
  %v21 = vxor.u32 %v17, 2147483648
  %v22 = vxor.u32 %v18, 2147483648
  %v23 = vmul.f32 %v21, 1.442695
  %v24 = vpow.pop %v23
  %v25 = vmul.f32 %v22, 1.442695
  %v26 = vpow.pop %v25
  %v27 = vadd.f32 %v24, 1.0
  %v28 = vadd.f32 %v26, 1.0
  %v29 = vrcp.pop %v27
  %v30 = vmul.f32 %v27, %v29
  %v31 = vsub.f32 1.0, %v30
  %v32 = vmul.f32 %v29, %v31
  %v33 = vadd.f32 %v29, %v32
  %vm34 = vweird.f32 %v27
  %vm35 = vweird.f32 %v29
  %vm36 = vmor %vm34, %vm35
  %v37 = vsel %vm36, %v29, %v33
  %v38 = vand.u32 2147483647, %v27
  %vm39 = vcmp.eq.f32.partialorder %v38, 8.507059e+37
  %v40 = vand.u32 %v27, 2147483648
  %v41 = vor.u32 1.1754944e-38, %v40
  %v42 = vsel %vm39, %v41, %v37
  %v43 = vmul.f32 1.0, %v42
  %v44 = vrcp.pop %v28
  %v45 = vmul.f32 %v28, %v44
  %v46 = vsub.f32 1.0, %v45
  %v47 = vmul.f32 %v44, %v46
  %v48 = vadd.f32 %v44, %v47
  %vm49 = vweird.f32 %v28
  %vm50 = vweird.f32 %v44
  %vm51 = vmor %vm49, %vm50
  %v52 = vsel %vm51, %v44, %v48
  %v53 = vand.u32 2147483647, %v28
  %vm54 = vcmp.eq.f32.partialorder %v53, 8.507059e+37
  %v55 = vand.u32 %v28, 2147483648
  %v56 = vor.u32 1.1754944e-38, %v55
  %v57 = vsel %vm54, %v56, %v52
  %v58 = vmul.f32 1.0, %v57
  %v59 = vsub.f32 %v19, %v43
  %v60 = vsub.f32 %v20, %v58
  %v61 = vand.u32 2147483647, %v59
  %v62 = vand.u32 2147483647, %v60
  %v63 = vmul.f32 %v61, %v61
  %v64 = vmul.f32 %v62, %v62
  %v65 = vstv %s16
  %v66 = vmul.f32 %v65, %v63
  %v67 = vmul.f32 %v65, %v64
  %68 = vst [vmem:[%s3] sm:$0xff] %v66
  %69 = vst [vmem:[%s3 + $0x8] sm:$0xff] %v67
  // Predicated region
  $region14: #{focal_loss.3} parent=0 // pred_check
    _
  $region15: #{focal_loss.3} parent=0 // pred_check_branch
    %71 = sbr.rel (0) target = $region17
  $region16: #{focal_loss.3} parent=0 // pred_region
    _
  $region17: #{focal_loss.3} parent=0 // pred_fallthru
    _
  // Predicated region
  $region18: #{focal_loss.3} parent=0 // pred_check
    _
  $region19: #{focal_loss.3} parent=0 // pred_check_branch
    %73 = sbr.rel (0) target = $region21
  $region20: #{focal_loss.3} parent=0 // pred_region
    _
  $region21: #{focal_loss.3} parent=0 // pred_fallthru
    _

// kernel: focal_loss.2
$region0: #{focal_loss.2}
  #allocation0 [shape = 'u32[]', space=smem, size = 0x4, offset = 0x4, fixed_abs, tag = 'smem constant byte address 0x4 - core index']
  #allocation1 [shape = 'u32[72,128]{1,0:T(1,128)}', space=vmem, size = 0x9000, scoped, tag = 'internal scratch']
  #allocation2 [shape = 'f32[16,128]{1,0:T(8,128)}', space=vmem, size = 0x2000, scoped, tag = 'scratch operand']
  %s0 = inlined_call_operand.vmem [shape: f32[16,128], index: 0, kind: input, shape index: {}]
  %s1 = inlined_call_operand.vmem [shape: f32[16,128], index: 1, kind: input, shape index: {}]
  %s2 = inlined_call_operand.hbm [shape: f32[1,1], index: 2, kind: output, shape index: {}]
  %s3 = sld [smem:[#allocation0]]
  $region26: #{focal_loss.2} parent=0
    _
  %s5 = ssub.s32 1, %s3
  %s6 = scalar_select 0, %s5, %s3
  $region1: #{focal_loss.2} parent=0
    #allocation3 [shape = 'u8[512]{0}', space=vmem, size = 0x400, scoped, tag = 'output window, operand 0, single buffered']
    #allocation4 [shape = 's32[1]{0}', space=sflag, size = 0x4, scoped, tag = 'scoped memory for focal_loss.2']
    %7 = vsyncpa [#allocation4], 0
    // Predicated region
    $region2: #{focal_loss.2} parent=1 // pred_check
      _
    $region3: #{focal_loss.2} parent=1 // pred_check_branch
      %9 = sbr.rel (0) target = $region5
    $region4: #{focal_loss.2} parent=1 // pred_region
      _
    $region5: #{focal_loss.2} parent=1 // pred_fallthru
      _
    // Predicated region
    $region6: #{focal_loss.2} parent=1 // pred_check
      _
    $region7: #{focal_loss.2} parent=1 // pred_check_branch
      %11 = sbr.rel (0) target = $region9
    $region8: #{focal_loss.2} parent=1 // pred_region
      _
    $region9: #{focal_loss.2} parent=1 // pred_fallthru
      _
    %p12 = scmp.eq.s32.totalorder 0, 0
    // Predicated region
    $region10: #{focal_loss.2} parent=1 // pred_check
      %p13 = pneg %p12
    $region11: #{focal_loss.2} parent=1 // pred_check_branch
      %15 = sbr.rel (%p13) target = $region13
    $region12: #{focal_loss.2} parent=1 // pred_region
      %16 = vst [vmem:[#allocation2] sm:$0xff] 0.0
      %17 = vst [vmem:[#allocation2 + $0x8] sm:$0xff] 0.0
    $region13: #{focal_loss.2} parent=1 // pred_fallthru
      _
    %v18 = vld [vmem:[%s0] sm:$0xff]
    %v19 = vld [vmem:[%s0 + $0x8] sm:$0xff]
    %v20 = vld [vmem:[%s1] sm:$0xff]
    %v21 = vld [vmem:[%s1 + $0x8] sm:$0xff]
    %v22 = vmax.f32 %v18, 0.0
    %v23 = vmax.f32 %v19, 0.0
    %v24 = vmul.f32 %v18, %v20
    %v25 = vmul.f32 %v19, %v21
    %v26 = vsub.f32 %v22, %v24
    %v27 = vsub.f32 %v23, %v25
    %v28 = vand.u32 2147483647, %v18
    %v29 = vand.u32 2147483647, %v19
    %v30 = vsub.f32 0.0, %v28
    %v31 = vsub.f32 0.0, %v29
    %v32 = vmul.f32 %v30, 1.442695
    %v33 = vpow.pop %v32
    %v34 = vmul.f32 %v31, 1.442695
    %v35 = vpow.pop %v34
    %v36 = vadd.f32 %v33, 1.0
    %v37 = vlog2.pop %v36
    %v38 = vmul.f32 %v37, 0.6931472
    %v39 = vmul.f32 -0.5, %v33
    %v40 = vadd.f32 %v39, 1.0
    %v41 = vmul.f32 %v40, %v33
    %v42 = vand.u32 2147483647, %v33
    %vm43 = vcmp.lt.f32.partialorder %v42, 0.0004427343
    %v44 = vsel %vm43, %v41, %v38
    %v45 = vadd.f32 %v35, 1.0
    %v46 = vlog2.pop %v45
    %v47 = vmul.f32 %v46, 0.6931472
    %v48 = vmul.f32 -0.5, %v35
    %v49 = vadd.f32 %v48, 1.0
    %v50 = vmul.f32 %v49, %v35
    %v51 = vand.u32 2147483647, %v35
    %vm52 = vcmp.lt.f32.partialorder %v51, 0.0004427343
    %v53 = vsel %vm52, %v50, %v47
    %v54 = vadd.f32 %v26, %v44
    %v55 = vadd.f32 %v27, %v53
    %v56 = vld [vmem:[#allocation2] sm:$0xff]
    %v57 = vld [vmem:[#allocation2 + $0x8] sm:$0xff]
    %v58 = vadd.f32 %v56, %v54
    %v59 = vadd.f32 %v57, %v55
    %60 = vst [vmem:[#allocation2] sm:$0xff] %v58
    %61 = vst [vmem:[#allocation2 + $0x8] sm:$0xff] %v59
    // Predicated region
    $region14: #{focal_loss.2} parent=1 // pred_check
      %p62 = pneg %p12
    $region15: #{focal_loss.2} parent=1 // pred_check_branch
      %64 = sbr.rel (%p62) target = $region17
    $region16: #{focal_loss.2} parent=1 // pred_region
      %v65 = vld [vmem:[#allocation2] sm:$0xff]
      %v66 = vld [vmem:[#allocation2 + $0x8] sm:$0xff]
      %v67 = vadd.f32 %v65, %v66
      %68 = vadd.xlane.f32.xlu0 %v67
      %v69 = vpop.xlane.xlu0 %68
      %v70 = vrot.slane %v69, 4
      %v71 = vadd.f32 %v69, %v70
      %v72 = vrot.slane %v71, 2
      %v73 = vadd.f32 %v71, %v72
      %v74 = vrot.slane %v73, 1
      %v75 = vadd.f32 %v73, %v74
      %s76 = vtos %v75
      %v77 = vstv %s76
      %v78 = vadd.f32 %v77, 0.0
      %vm79 = vcmask 0
      %80 = vst.msk [vmem:[#allocation3] sm:$0x1] %vm79, %v78
    $region17: #{focal_loss.2} parent=1 // pred_fallthru
      _
    // Predicated region
    $region18: #{focal_loss.2} parent=1 // pred_check
      _
    $region19: #{focal_loss.2} parent=1 // pred_check_branch
      %82 = sbr.rel (0) target = $region21
    $region20: #{focal_loss.2} parent=1 // pred_region
      %84 = vsyncadd [#allocation4], 0
      %s86 = sshll.u32 [#allocation3], 4
      %s87 = int_to_ptr.vmem [resolvable:$true] %s86
      %s88 = sshll.u32 %s2, 4
      %s89 = int_to_ptr.hbm [resolvable:$true] %s88
      %91 = dma.vmem_to_hbm [thread:$0]  %s87, 16, %s89, [#allocation4]
    $region21: #{focal_loss.2} parent=1 // pred_fallthru
      _
    // Predicated region
    $region22: #{focal_loss.2} parent=1 // pred_check
      _
    $region23: #{focal_loss.2} parent=1 // pred_check_branch
      %93 = sbr.rel (0) target = $region25
    $region24: #{focal_loss.2} parent=1 // pred_region
      %95 = dma.done [#allocation4], 16
    $region25: #{focal_loss.2} parent=1 // pred_fallthru
      _
    %96 = vsyncpa [#allocation4], 1

</llo_original>
